<compile_context>
chip_gen: v6e
topology: v6e:2x2x1
jax: 0.10.0
libtpu: 0.0.40
codegen_flags: <defaults>
</compile_context>

<pallas_src>
import jax
import jax.numpy as jnp
from jax import lax
from jax.experimental import pallas as pl
from jax.experimental.pallas import tpu as pltpu


# --------------------------------------------------------------------------
# Single fused kernel: conv + BN + ReLU + gather + full head
# --------------------------------------------------------------------------
def cnn1_fused_kernel(xs_ref, selT_ref, xfT_ref,
                      wc_ref, bc_ref, wf_ref, bf_ref,
                      w1a_ref, w1b_ref, b1_ref, w2_ref, b2_ref,
                      o_ref):
    # xs_ref   : (C_in*K, B*T)   im2col-stacked, zero-padded conv input
    # selT_ref : (B*T, N)        one-hot gather (time steps with responses)
    # xfT_ref  : (F_full, N)     input_full, transposed (rows on lanes)
    # wc_ref   : (H_conv, C_in*K)  conv weight, BN folded
    # bc_ref   : (H_conv, 1)       conv bias, BN folded
    # wf_ref   : (H_full, F_full)  linear_full weight, BN folded
    # bf_ref   : (H_full, 1)
    # w1a_ref  : (H_combo, H_conv) linear1_combo (conv half), BN folded
    # w1b_ref  : (H_combo, H_full) linear1_combo (full half), BN folded
    # b1_ref   : (H_combo, 1)
    # w2_ref   : (1, H_combo)      linear2_combo weight
    # b2_ref   : (1, 1)            linear2_combo bias
    # o_ref    : (1, N)            lane-dense output row

    # Conv1d ("same" padding) + folded BN(eval) + ReLU over all batches/times.
    conv = jnp.dot(wc_ref[...], xs_ref[...],
                   preferred_element_type=jnp.float32) + bc_ref[...]
    conv = jnp.maximum(conv, 0.0)                             # (H_conv, B*T)

    # Ragged gather of response time steps, realized as a one-hot matmul.
    gath = jnp.dot(conv, selT_ref[...],
                   preferred_element_type=jnp.float32)        # (H_conv, N)

    # linear_full + folded BN(eval) + ReLU (dropout = identity in eval mode).
    hf = jnp.dot(wf_ref[...], xfT_ref[...],
                 preferred_element_type=jnp.float32) + bf_ref[...]
    hf = jnp.maximum(hf, 0.0)                                 # (H_full, N)

    # linear1_combo on concat([gathered_conv, hidden_full]) as a split matmul,
    # + folded BN(eval) + ReLU (dropout = identity in eval mode).
    hc = (jnp.dot(w1a_ref[...], gath, preferred_element_type=jnp.float32)
          + jnp.dot(w1b_ref[...], hf, preferred_element_type=jnp.float32)
          + b1_ref[...])
    hc = jnp.maximum(hc, 0.0)                                 # (H_combo, N)

    # linear2_combo -> single lane-dense row.
    o_ref[...] = jnp.dot(w2_ref[...], hc,
                         preferred_element_type=jnp.float32) + b2_ref[...]


# --------------------------------------------------------------------------
# One-time parameter prep: fold BN (eval) into weights, pre-layout for kernel
# --------------------------------------------------------------------------
def prepare_cnn1_params(p):
    H_conv, C_in, K = p["Wc"].shape
    W1 = p["sc"][:, None] * p["W1"]          # fold combo-BN scale into W1
    return {
        "K": K,
        "pad": (K - 1) // 2,
        "Wc": (p["s_conv"][:, None, None] * p["Wc"]).reshape(H_conv, C_in * K),
        "bc": (p["s_conv"] * p["bc"] + p["sh_conv"]).reshape(H_conv, 1),
        "Wf": p["sf"][:, None] * p["Wf"],
        "bf": (p["sf"] * p["bf"] + p["shf"]).reshape(-1, 1),
        "W1a": W1[:, :H_conv],
        "W1b": W1[:, H_conv:],
        "b1": (p["sc"] * p["b1"] + p["shc"]).reshape(-1, 1),
        "W2": p["W2"],
        "b2": p["b2"].reshape(1, 1),
    }


# --------------------------------------------------------------------------
# Forward wrapper: per-call input layout (im2col + one-hot gather) + 1 kernel
# --------------------------------------------------------------------------
def cnn1_forward(prep, input_conv, input_full, y_ind_by_site):
    B, C_in, T = input_conv.shape
    K, pad = prep["K"], prep["pad"]

    # im2col stack: xs[c*K + k, b*T + t] = x_pad[b, c, t + k]
    x_pad = jnp.pad(input_conv, ((0, 0), (0, 0), (pad, pad)))
    cols = jnp.stack([x_pad[:, :, k:k + T] for k in range(K)], axis=2)  # (B,C,K,T)
    xs = cols.transpose(1, 2, 0, 3).reshape(C_in * K, B * T)

    # Ragged gather indices (site i, time idx) -> flattened column i*T + idx.
    flat_idx = jnp.concatenate(
        [i * T + jnp.asarray(idx, jnp.int32) for i, idx in enumerate(y_ind_by_site)])
    N = int(flat_idx.shape[0])
    selT = jax.nn.one_hot(flat_idx, B * T, dtype=jnp.float32).T      # (B*T, N)

    xfT = input_full.T                                               # (F_full, N)

    vmem = pl.BlockSpec(memory_space=pltpu.MemorySpace.VMEM)
    args = (xs, selT, xfT, prep["Wc"], prep["bc"], prep["Wf"], prep["bf"],
            prep["W1a"], prep["W1b"], prep["b1"], prep["W2"], prep["b2"])
    out_row = pl.pallas_call(
        cnn1_fused_kernel,
        out_shape=jax.ShapeDtypeStruct((1, N), jnp.float32),
        in_specs=[vmem] * len(args),
        out_specs=vmem,
    )(*args)
    return out_row.reshape(N, 1)


# --------------------------------------------------------------------------
# Pure-JAX reference (sanity check)
# --------------------------------------------------------------------------
def cnn1_reference(params, input_conv, input_full, y_ind_by_site, pad):
    hc = lax.conv_general_dilated(
        input_conv, params["Wc"], window_strides=(1,), padding=[(pad, pad)],
        dimension_numbers=("NCH", "OIH", "NCH"))
    hc = hc + params["bc"][None, :, None]
    hc = hc * params["s_conv"][None, :, None] + params["sh_conv"][None, :, None]
    hc = jnp.maximum(hc, 0.0)
    gathered = jnp.concatenate(
        [hc[i][:, idx].T for i, idx in enumerate(y_ind_by_site)], axis=0)
    hf = input_full @ params["Wf"].T + params["bf"]
    hf = jnp.maximum(hf * params["sf"] + params["shf"], 0.0)
    cat = jnp.concatenate([gathered, hf], axis=1)
    h1 = cat @ params["W1"].T + params["b1"]
    h1 = jnp.maximum(h1 * params["sc"] + params["shc"], 0.0)
    return h1 @ params["W2"].T + params["b2"]


if __name__ == "__main__":
    # Module hyper-parameters (small shapes)
    C_in, H_conv, K, pad = 4, 8, 3, 1
    F_full, H_full, H_combo = 6, 16, 32
    B, T = 2, 8
    eps = 1e-5

    key = jax.random.PRNGKey(0)
    ks = jax.random.split(key, 10)

    def bn_fold(num_features):
        # BatchNorm1d eval-mode with freshly initialized running stats.
        gamma = jnp.ones((num_features,), jnp.float32)
        beta = jnp.zeros((num_features,), jnp.float32)
        rmean = jnp.zeros((num_features,), jnp.float32)
        rvar = jnp.ones((num_features,), jnp.float32)
        scale = gamma / jnp.sqrt(rvar + eps)
        shift = beta - rmean * scale
        return scale, shift

    s_conv, sh_conv = bn_fold(H_conv)
    sf, shf = bn_fold(H_full)
    sc, shc = bn_fold(H_combo)

    params = {
        "Wc": 0.1 * jax.random.normal(ks[0], (H_conv, C_in, K), jnp.float32),
        "bc": 0.1 * jax.random.normal(ks[1], (H_conv,), jnp.float32),
        "s_conv": s_conv, "sh_conv": sh_conv,
        "Wf": 0.1 * jax.random.normal(ks[2], (H_full, F_full), jnp.float32),
        "bf": 0.1 * jax.random.normal(ks[3], (H_full,), jnp.float32),
        "sf": sf, "shf": shf,
        "W1": 0.1 * jax.random.normal(ks[4], (H_combo, H_conv + H_full), jnp.float32),
        "b1": 0.1 * jax.random.normal(ks[5], (H_combo,), jnp.float32),
        "sc": sc, "shc": shc,
        "W2": 0.1 * jax.random.normal(ks[6], (1, H_combo), jnp.float32),
        "b2": 0.1 * jax.random.normal(ks[7], (1,), jnp.float32),
    }

    # Inputs
    input_conv = jax.random.normal(ks[8], (B, C_in, T), jnp.float32)
    y_ind_by_site = [jnp.array([1, 3, 5], jnp.int32),
                     jnp.array([0, 2, 4, 7], jnp.int32)]
    N = sum(int(v.shape[0]) for v in y_ind_by_site)          # = 7
    input_full = jax.random.normal(ks[9], (N, F_full), jnp.float32)

    # One-time prep (BN folding + weight layouts), then one fused kernel call.
    prep = prepare_cnn1_params(params)
    out = cnn1_forward(prep, input_conv, input_full, y_ind_by_site)
    out = jax.block_until_ready(out)

    ref = cnn1_reference(params, input_conv, input_full, y_ind_by_site, pad)
    assert out.shape == (N, 1)
    assert jnp.allclose(out, ref, rtol=1e-4, atol=1e-4), "mismatch vs reference"

    # TODO(synk): training-mode BatchNorm statistics / Dropout masks are not
    # modeled (eval-mode forward only, matching the reference semantics).
    print("KERNEL_OK")
</pallas_src>

<mosaic_0001>
module attributes {stable_mosaic.version = 11 : i64} {
  func.func @cnn1_fused_kernel(%arg0: memref<12x16xf32, #tpu.memory_space<vmem>>, %arg1: memref<16x7xf32, #tpu.memory_space<vmem>>, %arg2: memref<6x7xf32, #tpu.memory_space<vmem>>, %arg3: memref<8x12xf32, #tpu.memory_space<vmem>>, %arg4: memref<8x1xf32, #tpu.memory_space<vmem>>, %arg5: memref<16x6xf32, #tpu.memory_space<vmem>>, %arg6: memref<16x1xf32, #tpu.memory_space<vmem>>, %arg7: memref<32x8xf32, #tpu.memory_space<vmem>>, %arg8: memref<32x16xf32, #tpu.memory_space<vmem>>, %arg9: memref<32x1xf32, #tpu.memory_space<vmem>>, %arg10: memref<1x32xf32, #tpu.memory_space<vmem>>, %arg11: memref<1x1xf32, #tpu.memory_space<vmem>>, %arg12: memref<1x7xf32, #tpu.memory_space<vmem>>) attributes {dimension_semantics = [], scalar_prefetch = 0 : i64, scratch_operands = 0 : i64, tpu.core_type = #tpu.core_type<tc>} {
    %c0 = arith.constant 0 : index
    %c0_0 = arith.constant 0 : index
    %0 = vector.load %arg3[%c0, %c0_0] : memref<8x12xf32, #tpu.memory_space<vmem>>, vector<8x12xf32>
    %c0_1 = arith.constant 0 : index
    %c0_2 = arith.constant 0 : index
    %1 = vector.load %arg0[%c0_1, %c0_2] : memref<12x16xf32, #tpu.memory_space<vmem>>, vector<12x16xf32>
    %cst = arith.constant dense<0.000000e+00> : vector<8x16xf32>
    %2 = tpu.matmul %0, %1, %cst {dimension_numbers = #tpu.dot_dimension_numbers<[1], [0], [0], [1], [0, 0, 1, 1], [], []>} : vector<8x12xf32>, vector<12x16xf32>, vector<8x16xf32> -> vector<8x16xf32>
    %c0_3 = arith.constant 0 : index
    %c0_4 = arith.constant 0 : index
    %3 = vector.load %arg4[%c0_3, %c0_4] : memref<8x1xf32, #tpu.memory_space<vmem>>, vector<8x1xf32>
    %4 = vector.broadcast %3 : vector<8x1xf32> to vector<8x16xf32>
    %5 = arith.addf %2, %4 : vector<8x16xf32>
    %cst_5 = arith.constant 0.000000e+00 : f32
    %6 = vector.broadcast %cst_5 : f32 to vector<8x16xf32>
    %7 = arith.maximumf %5, %6 : vector<8x16xf32>
    %c0_6 = arith.constant 0 : index
    %c0_7 = arith.constant 0 : index
    %8 = vector.load %arg1[%c0_6, %c0_7] : memref<16x7xf32, #tpu.memory_space<vmem>>, vector<16x7xf32>
    %cst_8 = arith.constant dense<0.000000e+00> : vector<8x7xf32>
    %9 = tpu.matmul %7, %8, %cst_8 {dimension_numbers = #tpu.dot_dimension_numbers<[1], [0], [0], [1], [0, 0, 1, 1], [], []>} : vector<8x16xf32>, vector<16x7xf32>, vector<8x7xf32> -> vector<8x7xf32>
    %c0_9 = arith.constant 0 : index
    %c0_10 = arith.constant 0 : index
    %10 = vector.load %arg5[%c0_9, %c0_10] : memref<16x6xf32, #tpu.memory_space<vmem>>, vector<16x6xf32>
    %c0_11 = arith.constant 0 : index
    %c0_12 = arith.constant 0 : index
    %11 = vector.load %arg2[%c0_11, %c0_12] : memref<6x7xf32, #tpu.memory_space<vmem>>, vector<6x7xf32>
    %cst_13 = arith.constant dense<0.000000e+00> : vector<16x7xf32>
    %12 = tpu.matmul %10, %11, %cst_13 {dimension_numbers = #tpu.dot_dimension_numbers<[1], [0], [0], [1], [0, 0, 1, 1], [], []>} : vector<16x6xf32>, vector<6x7xf32>, vector<16x7xf32> -> vector<16x7xf32>
    %c0_14 = arith.constant 0 : index
    %c0_15 = arith.constant 0 : index
    %13 = vector.load %arg6[%c0_14, %c0_15] : memref<16x1xf32, #tpu.memory_space<vmem>>, vector<16x1xf32>
    %14 = vector.broadcast %13 : vector<16x1xf32> to vector<16x7xf32>
    %15 = arith.addf %12, %14 : vector<16x7xf32>
    %cst_16 = arith.constant 0.000000e+00 : f32
    %16 = vector.broadcast %cst_16 : f32 to vector<16x7xf32>
    %17 = arith.maximumf %15, %16 : vector<16x7xf32>
    %c0_17 = arith.constant 0 : index
    %c0_18 = arith.constant 0 : index
    %18 = vector.load %arg7[%c0_17, %c0_18] : memref<32x8xf32, #tpu.memory_space<vmem>>, vector<32x8xf32>
    %cst_19 = arith.constant dense<0.000000e+00> : vector<32x7xf32>
    %19 = tpu.matmul %18, %9, %cst_19 {dimension_numbers = #tpu.dot_dimension_numbers<[1], [0], [0], [1], [0, 0, 1, 1], [], []>} : vector<32x8xf32>, vector<8x7xf32>, vector<32x7xf32> -> vector<32x7xf32>
    %c0_20 = arith.constant 0 : index
    %c0_21 = arith.constant 0 : index
    %20 = vector.load %arg8[%c0_20, %c0_21] : memref<32x16xf32, #tpu.memory_space<vmem>>, vector<32x16xf32>
    %cst_22 = arith.constant dense<0.000000e+00> : vector<32x7xf32>
    %21 = tpu.matmul %20, %17, %cst_22 {dimension_numbers = #tpu.dot_dimension_numbers<[1], [0], [0], [1], [0, 0, 1, 1], [], []>} : vector<32x16xf32>, vector<16x7xf32>, vector<32x7xf32> -> vector<32x7xf32>
    %22 = arith.addf %19, %21 : vector<32x7xf32>
    %c0_23 = arith.constant 0 : index
    %c0_24 = arith.constant 0 : index
    %23 = vector.load %arg9[%c0_23, %c0_24] : memref<32x1xf32, #tpu.memory_space<vmem>>, vector<32x1xf32>
    %24 = vector.broadcast %23 : vector<32x1xf32> to vector<32x7xf32>
    %25 = arith.addf %22, %24 : vector<32x7xf32>
    %cst_25 = arith.constant 0.000000e+00 : f32
    %26 = vector.broadcast %cst_25 : f32 to vector<32x7xf32>
    %27 = arith.maximumf %25, %26 : vector<32x7xf32>
    %c0_26 = arith.constant 0 : index
    %c0_27 = arith.constant 0 : index
    %28 = vector.load %arg10[%c0_26, %c0_27] : memref<1x32xf32, #tpu.memory_space<vmem>>, vector<1x32xf32>
    %cst_28 = arith.constant dense<0.000000e+00> : vector<1x7xf32>
    %29 = tpu.matmul %28, %27, %cst_28 {dimension_numbers = #tpu.dot_dimension_numbers<[1], [0], [0], [1], [0, 0, 1, 1], [], []>} : vector<1x32xf32>, vector<32x7xf32>, vector<1x7xf32> -> vector<1x7xf32>
    %c0_29 = arith.constant 0 : index
    %c0_30 = arith.constant 0 : index
    %30 = vector.load %arg11[%c0_29, %c0_30] : memref<1x1xf32, #tpu.memory_space<vmem>>, vector<1x1xf32>
    %31 = vector.broadcast %30 : vector<1x1xf32> to vector<1x7xf32>
    %32 = arith.addf %29, %31 : vector<1x7xf32>
    %c0_31 = arith.constant 0 : index
    %c0_32 = arith.constant 0 : index
    %33 = vector.load %arg12[%c0_31, %c0_32] : memref<1x7xf32, #tpu.memory_space<vmem>>, vector<1x7xf32>
    tpu.vector_store %arg12[%c0_31, %c0_32], %32 {strides = array<i32>} : memref<1x7xf32, #tpu.memory_space<vmem>>, vector<1x7xf32>,
    return
  }
}

</mosaic_0001>

<llo_original>
// kernel: tpu_custom_call.1
$region0: #{tpu_custom_call.1}
  #allocation0 [shape = 'u32[]', space=smem, size = 0x4, offset = 0x4, fixed_abs, tag = 'smem constant byte address 0x4 - core index']
  #allocation1 [shape = 'u32[144,128]{1,0:T(1,128)}', space=vmem, size = 0x12000, scoped, tag = 'internal scratch']
  #allocation2 [shape = 'f32[1,1]{1,0:T(1,128)S(1)}', space=vmem, size = 0x200, scoped, tag = 'scoped memory for tpu_custom_call.1']
  %s0 = inlined_call_operand.vmem [shape: f32[12,16], index: 0, kind: input, shape index: {}]
  %s1 = inlined_call_operand.vmem [shape: f32[16,7], index: 1, kind: input, shape index: {}]
  %s2 = inlined_call_operand.vmem [shape: f32[6,7], index: 2, kind: input, shape index: {}]
  %s3 = inlined_call_operand.vmem [shape: f32[8,12], index: 3, kind: input, shape index: {}]
  %s4 = inlined_call_operand.vmem [shape: f32[8,1], index: 4, kind: input, shape index: {}]
  %s5 = inlined_call_operand.vmem [shape: f32[16,6], index: 5, kind: input, shape index: {}]
  %s6 = inlined_call_operand.vmem [shape: f32[16,1], index: 6, kind: input, shape index: {}]
  %s7 = inlined_call_operand.vmem [shape: f32[32,8], index: 7, kind: input, shape index: {}]
  %s8 = inlined_call_operand.vmem [shape: f32[32,16], index: 8, kind: input, shape index: {}]
  %s9 = inlined_call_operand.vmem [shape: f32[32,1], index: 9, kind: input, shape index: {}]
  %s10 = inlined_call_operand.vmem [shape: f32[1,32], index: 10, kind: input, shape index: {}]
  %s11 = inlined_call_operand.<no memory space> [shape: f32[1,1], index: 11, kind: input, shape index: {}]
  %s12 = inlined_call_operand.hbm [shape: f32[1,7], index: 12, kind: output, shape index: {}]
  %s13 = sld [smem:[#allocation0]]
  $region58: #{tpu_custom_call.1} parent=0
    _
  %s15 = ssub.s32 1, %s13
  %s16 = scalar_select 0, %s15, %s13
  %v17 = vstv %s11
  %18 = vst [vmem:[#allocation2] sm:$0x1] %v17
  $region1: #{tpu_custom_call.1} parent=0
    #allocation3 [shape = 'u8[512]{0}', space=vmem, size = 0x400, scoped, tag = 'output window, operand 0, single buffered']
    #allocation4 [shape = 's32[1]{0}', space=sflag, size = 0x4, scoped, tag = 'scoped memory for tpu_custom_call.1']
    %19 = vsyncpa [#allocation4], 0
    // Predicated region
    $region2: #{tpu_custom_call.1} parent=1 // pred_check
      _
    $region3: #{tpu_custom_call.1} parent=1 // pred_check_branch
      %21 = sbr.rel (0) target = $region5
    $region4: #{tpu_custom_call.1} parent=1 // pred_region
      _
    $region5: #{tpu_custom_call.1} parent=1 // pred_fallthru
      _
    // Predicated region
    $region6: #{tpu_custom_call.1} parent=1 // pred_check
      _
    $region7: #{tpu_custom_call.1} parent=1 // pred_check_branch
      %23 = sbr.rel (0) target = $region9
    $region8: #{tpu_custom_call.1} parent=1 // pred_region
      _
    $region9: #{tpu_custom_call.1} parent=1 // pred_fallthru
      _
    // Predicated region
    $region10: #{tpu_custom_call.1} parent=1 // pred_check
      _
    $region11: #{tpu_custom_call.1} parent=1 // pred_check_branch
      %25 = sbr.rel (0) target = $region13
    $region12: #{tpu_custom_call.1} parent=1 // pred_region
      _
    $region13: #{tpu_custom_call.1} parent=1 // pred_fallthru
      _
    // Predicated region
    $region14: #{tpu_custom_call.1} parent=1 // pred_check
      _
    $region15: #{tpu_custom_call.1} parent=1 // pred_check_branch
      %27 = sbr.rel (0) target = $region17
    $region16: #{tpu_custom_call.1} parent=1 // pred_region
      _
    $region17: #{tpu_custom_call.1} parent=1 // pred_fallthru
      _
    // Predicated region
    $region18: #{tpu_custom_call.1} parent=1 // pred_check
      _
    $region19: #{tpu_custom_call.1} parent=1 // pred_check_branch
      %29 = sbr.rel (0) target = $region21
    $region20: #{tpu_custom_call.1} parent=1 // pred_region
      _
    $region21: #{tpu_custom_call.1} parent=1 // pred_fallthru
      _
    // Predicated region
    $region22: #{tpu_custom_call.1} parent=1 // pred_check
      _
    $region23: #{tpu_custom_call.1} parent=1 // pred_check_branch
      %31 = sbr.rel (0) target = $region25
    $region24: #{tpu_custom_call.1} parent=1 // pred_region
      _
    $region25: #{tpu_custom_call.1} parent=1 // pred_fallthru
      _
    // Predicated region
    $region26: #{tpu_custom_call.1} parent=1 // pred_check
      _
    $region27: #{tpu_custom_call.1} parent=1 // pred_check_branch
      %33 = sbr.rel (0) target = $region29
    $region28: #{tpu_custom_call.1} parent=1 // pred_region
      _
    $region29: #{tpu_custom_call.1} parent=1 // pred_fallthru
      _
    // Predicated region
    $region30: #{tpu_custom_call.1} parent=1 // pred_check
      _
    $region31: #{tpu_custom_call.1} parent=1 // pred_check_branch
      %35 = sbr.rel (0) target = $region33
    $region32: #{tpu_custom_call.1} parent=1 // pred_region
      _
    $region33: #{tpu_custom_call.1} parent=1 // pred_fallthru
      _
    // Predicated region
    $region34: #{tpu_custom_call.1} parent=1 // pred_check
      _
    $region35: #{tpu_custom_call.1} parent=1 // pred_check_branch
      %37 = sbr.rel (0) target = $region37
    $region36: #{tpu_custom_call.1} parent=1 // pred_region
      _
    $region37: #{tpu_custom_call.1} parent=1 // pred_fallthru
      _
    // Predicated region
    $region38: #{tpu_custom_call.1} parent=1 // pred_check
      _
    $region39: #{tpu_custom_call.1} parent=1 // pred_check_branch
      %39 = sbr.rel (0) target = $region41
    $region40: #{tpu_custom_call.1} parent=1 // pred_region
      _
    $region41: #{tpu_custom_call.1} parent=1 // pred_fallthru
      _
    // Predicated region
    $region42: #{tpu_custom_call.1} parent=1 // pred_check
      _
    $region43: #{tpu_custom_call.1} parent=1 // pred_check_branch
      %41 = sbr.rel (0) target = $region45
    $region44: #{tpu_custom_call.1} parent=1 // pred_region
      _
    $region45: #{tpu_custom_call.1} parent=1 // pred_fallthru
      _
    // Predicated region
    $region46: #{tpu_custom_call.1} parent=1 // pred_check
      _
    $region47: #{tpu_custom_call.1} parent=1 // pred_check_branch
      %43 = sbr.rel (0) target = $region49
    $region48: #{tpu_custom_call.1} parent=1 // pred_region
      _
    $region49: #{tpu_custom_call.1} parent=1 // pred_fallthru
      _
    %v44 = vld [vmem:[%s3] sm:$0xff]
    %v45 = vld [vmem:[%s0] sm:$0xff]
    %v46 = vld [vmem:[%s0 + $0x8] sm:$0xf]
    %v47 = vld [vmem:[%s4] sm:$0xff]
    %49 = vset.pattern.permute.xlu0 0
    %50 = vperm.xlu0 %49, %v47
    %v51 = vpop.permute.xlu0 %50
    %vm53 = vcmask 97280
    %v55 = vsel %vm53, %v44, 0
    %vm57 = vcmask 1043456
    %v59 = vsel %vm57, %v46, 0
    %61 = vmatprep.subr.mxu0 0.0
    %62 = vmatpush1.msra.mxu0 0.0
    %63 = vmatprep.subr.mxu0 0.0
    %64 = vmatpush1.msra.mxu0 0.0
    %65 = vmatprep.subr.mxu0 0.0
    %66 = vmatpush1.msra.mxu0 0.0
    %67 = vmatprep.subr.mxu0 0.0
    %68 = vmatpush1.msra.mxu0 0.0
    %69 = vmatprep.subr.mxu0 0.0
    %70 = vmatpush1.msra.mxu0 0.0
    %71 = vmatprep.subr.mxu0 0.0
    %72 = vmatpush1.msra.mxu0 0.0
    %73 = vmatprep.subr.mxu0 0.0
    %74 = vmatpush1.msra.mxu0 0.0
    %75 = vmatprep.subr.mxu0 0.0
    %76 = vmatpush1.msra.mxu0 0.0
    %77 = vmatprep.subr.mxu0 0.0
    %78 = vmatpush1.msra.mxu0 0.0
    %79 = vmatprep.subr.mxu0 0.0
    %80 = vmatpush1.msra.mxu0 0.0
    %81 = vmatprep.subr.mxu0 0.0
    %82 = vmatpush1.msra.mxu0 0.0
    %83 = vmatprep.subr.mxu0 0.0
    %84 = vmatpush1.msra.mxu0 0.0
    %85 = vmatprep.subr.mxu0 0.0
    %86 = vmatpush1.msra.mxu0 0.0
    %87 = vmatprep.subr.mxu0 0.0
    %88 = vmatpush1.msra.mxu0 0.0
    %89 = vmatprep.subr.mxu0 0.0
    %90 = vmatpush1.msra.mxu0 %v59
    %91 = vmatprep.subr.mxu0 0.0
    %92 = vmatpush1.msra.mxu0 %v45
    %93 = vmatprep.subr.mxu0 0.0
    %94 = vmatpush2.msra.mxu0 0.0
    %95 = vmatprep.subr.mxu0 0.0
    %96 = vmatpush2.msra.mxu0 0.0
    %97 = vmatprep.subr.mxu0 0.0
    %98 = vmatpush2.msra.mxu0 0.0
    %99 = vmatprep.subr.mxu0 0.0
    %100 = vmatpush2.msra.mxu0 0.0
    %101 = vmatprep.subr.mxu0 0.0
    %102 = vmatpush2.msra.mxu0 0.0
    %103 = vmatprep.subr.mxu0 0.0
    %104 = vmatpush2.msra.mxu0 0.0
    %105 = vmatprep.subr.mxu0 0.0
    %106 = vmatpush2.msra.mxu0 0.0
    %107 = vmatprep.subr.mxu0 0.0
    %108 = vmatpush2.msra.mxu0 0.0
    %109 = vmatprep.subr.mxu0 0.0
    %110 = vmatpush2.msra.mxu0 0.0
    %111 = vmatprep.subr.mxu0 0.0
    %112 = vmatpush2.msra.mxu0 0.0
    %113 = vmatprep.subr.mxu0 0.0
    %114 = vmatpush2.msra.mxu0 0.0
    %115 = vmatprep.subr.mxu0 0.0
    %116 = vmatpush2.msra.mxu0 0.0
    %117 = vmatprep.subr.mxu0 0.0
    %118 = vmatpush2.msra.mxu0 0.0
    %119 = vmatprep.subr.mxu0 0.0
    %120 = vmatpush2.msra.mxu0 0.0
    %121 = vmatprep.subr.mxu0 0.0
    %122 = vmatpush2.msra.mxu0 0.0
    %123 = vmatprep.subr.mxu0 0.0
    %124 = vmatpush2.msra.mxu0 0.0
    %125 = vmatprep.mubr.f32.mxu0 0.0
    %126 = vmatmul.mubr.f32.gmra.mxu0 %v55
    %v127 = vpop.f32.mrf.mxu0
    %v128 = vadd.f32 %v51, %v127
    %v129 = vpop.f32.mrf.mxu0
    %130 = vdwg.mxu0
    %v131 = vmax.f32 %v128, 0.0
    %v132 = vld [vmem:[%s1] sm:$0xff]
    %v133 = vld [vmem:[%s1 + $0x8] sm:$0xff]
    %vm134 = vcmask 130048
    %v136 = vsel %vm134, %v131, 0
    %138 = vmatprep.subr.mxu0 0.0
    %139 = vmatpush1.msra.mxu0 0.0
    %140 = vmatprep.subr.mxu0 0.0
    %141 = vmatpush1.msra.mxu0 0.0
    %142 = vmatprep.subr.mxu0 0.0
    %143 = vmatpush1.msra.mxu0 0.0
    %144 = vmatprep.subr.mxu0 0.0
    %145 = vmatpush1.msra.mxu0 0.0
    %146 = vmatprep.subr.mxu0 0.0
    %147 = vmatpush1.msra.mxu0 0.0
    %148 = vmatprep.subr.mxu0 0.0
    %149 = vmatpush1.msra.mxu0 0.0
    %150 = vmatprep.subr.mxu0 0.0
    %151 = vmatpush1.msra.mxu0 0.0
    %152 = vmatprep.subr.mxu0 0.0
    %153 = vmatpush1.msra.mxu0 0.0
    %154 = vmatprep.subr.mxu0 0.0
    %155 = vmatpush1.msra.mxu0 0.0
    %156 = vmatprep.subr.mxu0 0.0
    %157 = vmatpush1.msra.mxu0 0.0
    %158 = vmatprep.subr.mxu0 0.0
    %159 = vmatpush1.msra.mxu0 0.0
    %160 = vmatprep.subr.mxu0 0.0
    %161 = vmatpush1.msra.mxu0 0.0
    %162 = vmatprep.subr.mxu0 0.0
    %163 = vmatpush1.msra.mxu0 0.0
    %164 = vmatprep.subr.mxu0 0.0
    %165 = vmatpush1.msra.mxu0 0.0
    %166 = vmatprep.subr.mxu0 0.0
    %167 = vmatpush1.msra.mxu0 %v133
    %168 = vmatprep.subr.mxu0 0.0
    %169 = vmatpush1.msra.mxu0 %v132
    %170 = vmatprep.subr.mxu0 0.0
    %171 = vmatpush2.msra.mxu0 0.0
    %172 = vmatprep.subr.mxu0 0.0
    %173 = vmatpush2.msra.mxu0 0.0
    %174 = vmatprep.subr.mxu0 0.0
    %175 = vmatpush2.msra.mxu0 0.0
    %176 = vmatprep.subr.mxu0 0.0
    %177 = vmatpush2.msra.mxu0 0.0
    %178 = vmatprep.subr.mxu0 0.0
    %179 = vmatpush2.msra.mxu0 0.0
    %180 = vmatprep.subr.mxu0 0.0
    %181 = vmatpush2.msra.mxu0 0.0
    %182 = vmatprep.subr.mxu0 0.0
    %183 = vmatpush2.msra.mxu0 0.0
    %184 = vmatprep.subr.mxu0 0.0
    %185 = vmatpush2.msra.mxu0 0.0
    %186 = vmatprep.subr.mxu0 0.0
    %187 = vmatpush2.msra.mxu0 0.0
    %188 = vmatprep.subr.mxu0 0.0
    %189 = vmatpush2.msra.mxu0 0.0
    %190 = vmatprep.subr.mxu0 0.0
    %191 = vmatpush2.msra.mxu0 0.0
    %192 = vmatprep.subr.mxu0 0.0
    %193 = vmatpush2.msra.mxu0 0.0
    %194 = vmatprep.subr.mxu0 0.0
    %195 = vmatpush2.msra.mxu0 0.0
    %196 = vmatprep.subr.mxu0 0.0
    %197 = vmatpush2.msra.mxu0 0.0
    %198 = vmatprep.subr.mxu0 0.0
    %199 = vmatpush2.msra.mxu0 0.0
    %200 = vmatprep.subr.mxu0 0.0
    %201 = vmatpush2.msra.mxu0 0.0
    %202 = vmatprep.mubr.f32.mxu0 0.0
    %203 = vmatmul.mubr.f32.gmra.mxu0 %v136
    %v204 = vpop.f32.mrf.mxu0
    %v205 = vadd.f32 0.0, %v204
    %v206 = vpop.f32.mrf.mxu0
    %207 = vdwg.mxu0
    %v208 = vld [vmem:[%s5] sm:$0xff]
    %v209 = vld [vmem:[%s5 + $0x8] sm:$0xff]
    %v210 = vld [vmem:[%s2] sm:$0x3f]
    %v211 = vld [vmem:[%s6] sm:$0xff]
    %v212 = vld [vmem:[%s6 + $0x8] sm:$0xff]
    %214 = vset.pattern.permute.xlu0 0
    %215 = vperm.xlu0 %214, %v211
    %v216 = vpop.permute.xlu0 %215
    %219 = vset.pattern.permute.xlu0 0
    %220 = vperm.xlu0 %219, %v212
    %v221 = vpop.permute.xlu0 %220
    %vm223 = vcmask 48128
    %v225 = vsel %vm223, %v208, 0
    %v228 = vsel %vm223, %v209, 0
    %vm230 = vcmask 1045504
    %v232 = vsel %vm230, %v210, 0
    %234 = vmatprep.subr.mxu0 0.0
    %235 = vmatpush1.msra.mxu0 0.0
    %236 = vmatprep.subr.mxu0 0.0
    %237 = vmatpush1.msra.mxu0 0.0
    %238 = vmatprep.subr.mxu0 0.0
    %239 = vmatpush1.msra.mxu0 0.0
    %240 = vmatprep.subr.mxu0 0.0
    %241 = vmatpush1.msra.mxu0 0.0
    %242 = vmatprep.subr.mxu0 0.0
    %243 = vmatpush1.msra.mxu0 0.0
    %244 = vmatprep.subr.mxu0 0.0
    %245 = vmatpush1.msra.mxu0 0.0
    %246 = vmatprep.subr.mxu0 0.0
    %247 = vmatpush1.msra.mxu0 0.0
    %248 = vmatprep.subr.mxu0 0.0
    %249 = vmatpush1.msra.mxu0 0.0
    %250 = vmatprep.subr.mxu0 0.0
    %251 = vmatpush1.msra.mxu0 0.0
    %252 = vmatprep.subr.mxu0 0.0
    %253 = vmatpush1.msra.mxu0 0.0
    %254 = vmatprep.subr.mxu0 0.0
    %255 = vmatpush1.msra.mxu0 0.0
    %256 = vmatprep.subr.mxu0 0.0
    %257 = vmatpush1.msra.mxu0 0.0
    %258 = vmatprep.subr.mxu0 0.0
    %259 = vmatpush1.msra.mxu0 0.0
    %260 = vmatprep.subr.mxu0 0.0
    %261 = vmatpush1.msra.mxu0 0.0
    %262 = vmatprep.subr.mxu0 0.0
    %263 = vmatpush1.msra.mxu0 0.0
    %264 = vmatprep.subr.mxu0 0.0
    %265 = vmatpush1.msra.mxu0 %v232
    %266 = vmatprep.subr.mxu0 0.0
    %267 = vmatpush2.msra.mxu0 0.0
    %268 = vmatprep.subr.mxu0 0.0
    %269 = vmatpush2.msra.mxu0 0.0
    %270 = vmatprep.subr.mxu0 0.0
    %271 = vmatpush2.msra.mxu0 0.0
    %272 = vmatprep.subr.mxu0 0.0
    %273 = vmatpush2.msra.mxu0 0.0
    %274 = vmatprep.subr.mxu0 0.0
    %275 = vmatpush2.msra.mxu0 0.0
    %276 = vmatprep.subr.mxu0 0.0
    %277 = vmatpush2.msra.mxu0 0.0
    %278 = vmatprep.subr.mxu0 0.0
    %279 = vmatpush2.msra.mxu0 0.0
    %280 = vmatprep.subr.mxu0 0.0
    %281 = vmatpush2.msra.mxu0 0.0
    %282 = vmatprep.subr.mxu0 0.0
    %283 = vmatpush2.msra.mxu0 0.0
    %284 = vmatprep.subr.mxu0 0.0
    %285 = vmatpush2.msra.mxu0 0.0
    %286 = vmatprep.subr.mxu0 0.0
    %287 = vmatpush2.msra.mxu0 0.0
    %288 = vmatprep.subr.mxu0 0.0
    %289 = vmatpush2.msra.mxu0 0.0
    %290 = vmatprep.subr.mxu0 0.0
    %291 = vmatpush2.msra.mxu0 0.0
    %292 = vmatprep.subr.mxu0 0.0
    %293 = vmatpush2.msra.mxu0 0.0
    %294 = vmatprep.subr.mxu0 0.0
    %295 = vmatpush2.msra.mxu0 0.0
    %296 = vmatprep.subr.mxu0 0.0
    %297 = vmatpush2.msra.mxu0 0.0
    %298 = vmatprep.mubr.f32.mxu0 0.0
    %299 = vmatmul.mubr.f32.gmra.mxu0 %v225
    %v300 = vpop.f32.mrf.mxu0
    %v301 = vadd.f32 %v216, %v300
    %v302 = vpop.f32.mrf.mxu0
    %303 = vmatprep.mubr.f32.mxu0 0.0
    %304 = vmatmul.mubr.f32.gmra.mxu0 %v228
    %v305 = vpop.f32.mrf.mxu0
    %v306 = vadd.f32 %v221, %v305
    %v307 = vpop.f32.mrf.mxu0
    %308 = vdwg.mxu0
    %v309 = vmax.f32 %v301, 0.0
    %v310 = vmax.f32 %v306, 0.0
    %v311 = vld [vmem:[%s7] sm:$0xff]
    %v312 = vld [vmem:[%s7 + $0x8] sm:$0xff]
    %v313 = vld [vmem:[%s7 + $0x10] sm:$0xff]
    %v314 = vld [vmem:[%s7 + $0x18] sm:$0xff]
    %v315 = vld [vmem:[%s8] sm:$0xff]
    %v316 = vld [vmem:[%s8 + $0x8] sm:$0xff]
    %v317 = vld [vmem:[%s8 + $0x10] sm:$0xff]
    %v318 = vld [vmem:[%s8 + $0x18] sm:$0xff]
    %v320 = vsel %vm134, %v315, 0
    %v323 = vsel %vm134, %v316, 0
    %v326 = vsel %vm134, %v317, 0
    %v329 = vsel %vm134, %v318, 0
    %331 = vmatprep.subr.mxu0 0.0
    %332 = vmatpush1.msra.mxu0 0.0
    %333 = vmatprep.subr.mxu0 0.0
    %334 = vmatpush1.msra.mxu0 0.0
    %335 = vmatprep.subr.mxu0 0.0
    %336 = vmatpush1.msra.mxu0 0.0
    %337 = vmatprep.subr.mxu0 0.0
    %338 = vmatpush1.msra.mxu0 0.0
    %339 = vmatprep.subr.mxu0 0.0
    %340 = vmatpush1.msra.mxu0 0.0
    %341 = vmatprep.subr.mxu0 0.0
    %342 = vmatpush1.msra.mxu0 0.0
    %343 = vmatprep.subr.mxu0 0.0
    %344 = vmatpush1.msra.mxu0 0.0
    %345 = vmatprep.subr.mxu0 0.0
    %346 = vmatpush1.msra.mxu0 0.0
    %347 = vmatprep.subr.mxu0 0.0
    %348 = vmatpush1.msra.mxu0 0.0
    %349 = vmatprep.subr.mxu0 0.0
    %350 = vmatpush1.msra.mxu0 0.0
    %351 = vmatprep.subr.mxu0 0.0
    %352 = vmatpush1.msra.mxu0 0.0
    %353 = vmatprep.subr.mxu0 0.0
    %354 = vmatpush1.msra.mxu0 0.0
    %355 = vmatprep.subr.mxu0 0.0
    %356 = vmatpush1.msra.mxu0 0.0
    %357 = vmatprep.subr.mxu0 0.0
    %358 = vmatpush1.msra.mxu0 0.0
    %359 = vmatprep.subr.mxu0 0.0
    %360 = vmatpush1.msra.mxu0 %v310
    %361 = vmatprep.subr.mxu0 0.0
    %362 = vmatpush1.msra.mxu0 %v309
    %363 = vmatprep.subr.mxu0 0.0
    %364 = vmatpush2.msra.mxu0 0.0
    %365 = vmatprep.subr.mxu0 0.0
    %366 = vmatpush2.msra.mxu0 0.0
    %367 = vmatprep.subr.mxu0 0.0
    %368 = vmatpush2.msra.mxu0 0.0
    %369 = vmatprep.subr.mxu0 0.0
    %370 = vmatpush2.msra.mxu0 0.0
    %371 = vmatprep.subr.mxu0 0.0
    %372 = vmatpush2.msra.mxu0 0.0
    %373 = vmatprep.subr.mxu0 0.0
    %374 = vmatpush2.msra.mxu0 0.0
    %375 = vmatprep.subr.mxu0 0.0
    %376 = vmatpush2.msra.mxu0 0.0
    %377 = vmatprep.subr.mxu0 0.0
    %378 = vmatpush2.msra.mxu0 0.0
    %379 = vmatprep.subr.mxu0 0.0
    %380 = vmatpush2.msra.mxu0 0.0
    %381 = vmatprep.subr.mxu0 0.0
    %382 = vmatpush2.msra.mxu0 0.0
    %383 = vmatprep.subr.mxu0 0.0
    %384 = vmatpush2.msra.mxu0 0.0
    %385 = vmatprep.subr.mxu0 0.0
    %386 = vmatpush2.msra.mxu0 0.0
    %387 = vmatprep.subr.mxu0 0.0
    %388 = vmatpush2.msra.mxu0 0.0
    %389 = vmatprep.subr.mxu0 0.0
    %390 = vmatpush2.msra.mxu0 0.0
    %391 = vmatprep.subr.mxu0 0.0
    %392 = vmatpush2.msra.mxu0 0.0
    %393 = vmatprep.subr.mxu0 0.0
    %394 = vmatpush2.msra.mxu0 0.0
    %395 = vmatprep.mubr.f32.mxu0 0.0
    %396 = vmatmul.mubr.f32.gmra.mxu0 %v320
    %v397 = vpop.f32.mrf.mxu0
    %v398 = vadd.f32 0.0, %v397
    %v399 = vpop.f32.mrf.mxu0
    %400 = vmatprep.mubr.f32.mxu0 0.0
    %401 = vmatmul.mubr.f32.gmra.mxu0 %v323
    %v402 = vpop.f32.mrf.mxu0
    %v403 = vadd.f32 0.0, %v402
    %v404 = vpop.f32.mrf.mxu0
    %405 = vmatprep.mubr.f32.mxu0 0.0
    %406 = vmatmul.mubr.f32.gmra.mxu0 %v326
    %v407 = vpop.f32.mrf.mxu0
    %v408 = vadd.f32 0.0, %v407
    %v409 = vpop.f32.mrf.mxu0
    %410 = vmatprep.mubr.f32.mxu0 0.0
    %411 = vmatmul.mubr.f32.gmra.mxu0 %v329
    %v412 = vpop.f32.mrf.mxu0
    %v413 = vadd.f32 0.0, %v412
    %v414 = vpop.f32.mrf.mxu0
    %415 = vdwg.mxu0
    %vm416 = vcmask 64512
    %v418 = vsel %vm416, %v311, 0
    %v421 = vsel %vm416, %v312, 0
    %v424 = vsel %vm416, %v313, 0
    %v427 = vsel %vm416, %v314, 0
    %429 = vmatprep.subr.mxu0 0.0
    %430 = vmatpush1.msra.mxu0 0.0
    %431 = vmatprep.subr.mxu0 0.0
    %432 = vmatpush1.msra.mxu0 0.0
    %433 = vmatprep.subr.mxu0 0.0
    %434 = vmatpush1.msra.mxu0 0.0
    %435 = vmatprep.subr.mxu0 0.0
    %436 = vmatpush1.msra.mxu0 0.0
    %437 = vmatprep.subr.mxu0 0.0
    %438 = vmatpush1.msra.mxu0 0.0
    %439 = vmatprep.subr.mxu0 0.0
    %440 = vmatpush1.msra.mxu0 0.0
    %441 = vmatprep.subr.mxu0 0.0
    %442 = vmatpush1.msra.mxu0 0.0
    %443 = vmatprep.subr.mxu0 0.0
    %444 = vmatpush1.msra.mxu0 0.0
    %445 = vmatprep.subr.mxu0 0.0
    %446 = vmatpush1.msra.mxu0 0.0
    %447 = vmatprep.subr.mxu0 0.0
    %448 = vmatpush1.msra.mxu0 0.0
    %449 = vmatprep.subr.mxu0 0.0
    %450 = vmatpush1.msra.mxu0 0.0
    %451 = vmatprep.subr.mxu0 0.0
    %452 = vmatpush1.msra.mxu0 0.0
    %453 = vmatprep.subr.mxu0 0.0
    %454 = vmatpush1.msra.mxu0 0.0
    %455 = vmatprep.subr.mxu0 0.0
    %456 = vmatpush1.msra.mxu0 0.0
    %457 = vmatprep.subr.mxu0 0.0
    %458 = vmatpush1.msra.mxu0 0.0
    %459 = vmatprep.subr.mxu0 0.0
    %460 = vmatpush1.msra.mxu0 %v205
    %461 = vmatprep.subr.mxu0 0.0
    %462 = vmatpush2.msra.mxu0 0.0
    %463 = vmatprep.subr.mxu0 0.0
    %464 = vmatpush2.msra.mxu0 0.0
    %465 = vmatprep.subr.mxu0 0.0
    %466 = vmatpush2.msra.mxu0 0.0
    %467 = vmatprep.subr.mxu0 0.0
    %468 = vmatpush2.msra.mxu0 0.0
    %469 = vmatprep.subr.mxu0 0.0
    %470 = vmatpush2.msra.mxu0 0.0
    %471 = vmatprep.subr.mxu0 0.0
    %472 = vmatpush2.msra.mxu0 0.0
    %473 = vmatprep.subr.mxu0 0.0
    %474 = vmatpush2.msra.mxu0 0.0
    %475 = vmatprep.subr.mxu0 0.0
    %476 = vmatpush2.msra.mxu0 0.0
    %477 = vmatprep.subr.mxu0 0.0
    %478 = vmatpush2.msra.mxu0 0.0
    %479 = vmatprep.subr.mxu0 0.0
    %480 = vmatpush2.msra.mxu0 0.0
    %481 = vmatprep.subr.mxu0 0.0
    %482 = vmatpush2.msra.mxu0 0.0
    %483 = vmatprep.subr.mxu0 0.0
    %484 = vmatpush2.msra.mxu0 0.0
    %485 = vmatprep.subr.mxu0 0.0
    %486 = vmatpush2.msra.mxu0 0.0
    %487 = vmatprep.subr.mxu0 0.0
    %488 = vmatpush2.msra.mxu0 0.0
    %489 = vmatprep.subr.mxu0 0.0
    %490 = vmatpush2.msra.mxu0 0.0
    %491 = vmatprep.subr.mxu0 0.0
    %492 = vmatpush2.msra.mxu0 0.0
    %493 = vmatprep.mubr.f32.mxu0 0.0
    %494 = vmatmul.mubr.f32.gmra.mxu0 %v418
    %v495 = vpop.f32.mrf.mxu0
    %v496 = vadd.f32 %v398, %v495
    %v497 = vpop.f32.mrf.mxu0
    %498 = vmatprep.mubr.f32.mxu0 0.0
    %499 = vmatmul.mubr.f32.gmra.mxu0 %v421
    %v500 = vpop.f32.mrf.mxu0
    %v501 = vadd.f32 %v403, %v500
    %v502 = vpop.f32.mrf.mxu0
    %503 = vmatprep.mubr.f32.mxu0 0.0
    %504 = vmatmul.mubr.f32.gmra.mxu0 %v424
    %v505 = vpop.f32.mrf.mxu0
    %v506 = vadd.f32 %v408, %v505
    %v507 = vpop.f32.mrf.mxu0
    %508 = vmatprep.mubr.f32.mxu0 0.0
    %509 = vmatmul.mubr.f32.gmra.mxu0 %v427
    %v510 = vpop.f32.mrf.mxu0
    %v511 = vadd.f32 %v413, %v510
    %v512 = vpop.f32.mrf.mxu0
    %513 = vdwg.mxu0
    %v514 = vld [vmem:[%s9] sm:$0xff]
    %v515 = vld [vmem:[%s9 + $0x8] sm:$0xff]
    %v516 = vld [vmem:[%s9 + $0x10] sm:$0xff]
    %v517 = vld [vmem:[%s9 + $0x18] sm:$0xff]
    %519 = vset.pattern.permute.xlu0 0
    %520 = vperm.xlu0 %519, %v514
    %v521 = vpop.permute.xlu0 %520
    %524 = vset.pattern.permute.xlu0 0
    %525 = vperm.xlu0 %524, %v515
    %v526 = vpop.permute.xlu0 %525
    %529 = vset.pattern.permute.xlu0 0
    %530 = vperm.xlu0 %529, %v516
    %v531 = vpop.permute.xlu0 %530
    %534 = vset.pattern.permute.xlu0 0
    %535 = vperm.xlu0 %534, %v517
    %v536 = vpop.permute.xlu0 %535
    %v538 = vadd.f32 %v496, %v521
    %v539 = vadd.f32 %v501, %v526
    %v540 = vadd.f32 %v506, %v531
    %v541 = vadd.f32 %v511, %v536
    %v542 = vmax.f32 %v538, 0.0
    %v543 = vmax.f32 %v539, 0.0
    %v544 = vmax.f32 %v540, 0.0
    %v545 = vmax.f32 %v541, 0.0
    %v546 = vld [vmem:[%s10] sm:$0x1]
    %v547 = vld [vmem:[#allocation2] sm:$0x1]
    %549 = vset.pattern.permute.xlu0 0
    %550 = vperm.xlu0 %549, %v547
    %v551 = vpop.permute.xlu0 %550
    %v553 = vlaneseq
    %v554 = vshrl.u32 %v553, 7
    %v555 = vsub.s32 0, %v554
    %v556 = vrot.slane %v551, %v555
    %vm557 = vcmask 261120
    %v559 = vsel %vm557, %v546, 0
    %561 = vmatprep.subr.mxu0 0.0
    %562 = vmatpush1.msra.mxu0 0.0
    %563 = vmatprep.subr.mxu0 0.0
    %564 = vmatpush1.msra.mxu0 0.0
    %565 = vmatprep.subr.mxu0 0.0
    %566 = vmatpush1.msra.mxu0 0.0
    %567 = vmatprep.subr.mxu0 0.0
    %568 = vmatpush1.msra.mxu0 0.0
    %569 = vmatprep.subr.mxu0 0.0
    %570 = vmatpush1.msra.mxu0 0.0
    %571 = vmatprep.subr.mxu0 0.0
    %572 = vmatpush1.msra.mxu0 0.0
    %573 = vmatprep.subr.mxu0 0.0
    %574 = vmatpush1.msra.mxu0 0.0
    %575 = vmatprep.subr.mxu0 0.0
    %576 = vmatpush1.msra.mxu0 0.0
    %577 = vmatprep.subr.mxu0 0.0
    %578 = vmatpush1.msra.mxu0 0.0
    %579 = vmatprep.subr.mxu0 0.0
    %580 = vmatpush1.msra.mxu0 0.0
    %581 = vmatprep.subr.mxu0 0.0
    %582 = vmatpush1.msra.mxu0 0.0
    %583 = vmatprep.subr.mxu0 0.0
    %584 = vmatpush1.msra.mxu0 0.0
    %585 = vmatprep.subr.mxu0 0.0
    %586 = vmatpush1.msra.mxu0 %v545
    %587 = vmatprep.subr.mxu0 0.0
    %588 = vmatpush1.msra.mxu0 %v544
    %589 = vmatprep.subr.mxu0 0.0
    %590 = vmatpush1.msra.mxu0 %v543
    %591 = vmatprep.subr.mxu0 0.0
    %592 = vmatpush1.msra.mxu0 %v542
    %593 = vmatprep.subr.mxu0 0.0
    %594 = vmatpush2.msra.mxu0 0.0
    %595 = vmatprep.subr.mxu0 0.0
    %596 = vmatpush2.msra.mxu0 0.0
    %597 = vmatprep.subr.mxu0 0.0
    %598 = vmatpush2.msra.mxu0 0.0
    %599 = vmatprep.subr.mxu0 0.0
    %600 = vmatpush2.msra.mxu0 0.0
    %601 = vmatprep.subr.mxu0 0.0
    %602 = vmatpush2.msra.mxu0 0.0
    %603 = vmatprep.subr.mxu0 0.0
    %604 = vmatpush2.msra.mxu0 0.0
    %605 = vmatprep.subr.mxu0 0.0
    %606 = vmatpush2.msra.mxu0 0.0
    %607 = vmatprep.subr.mxu0 0.0
    %608 = vmatpush2.msra.mxu0 0.0
    %609 = vmatprep.subr.mxu0 0.0
    %610 = vmatpush2.msra.mxu0 0.0
    %611 = vmatprep.subr.mxu0 0.0
    %612 = vmatpush2.msra.mxu0 0.0
    %613 = vmatprep.subr.mxu0 0.0
    %614 = vmatpush2.msra.mxu0 0.0
    %615 = vmatprep.subr.mxu0 0.0
    %616 = vmatpush2.msra.mxu0 0.0
    %617 = vmatprep.subr.mxu0 0.0
    %618 = vmatpush2.msra.mxu0 0.0
    %619 = vmatprep.subr.mxu0 0.0
    %620 = vmatpush2.msra.mxu0 0.0
    %621 = vmatprep.subr.mxu0 0.0
    %622 = vmatpush2.msra.mxu0 0.0
    %623 = vmatprep.subr.mxu0 0.0
    %624 = vmatpush2.msra.mxu0 0.0
    %625 = vmatprep.mubr.f32.mxu0 0.0
    %626 = vmatmul.mubr.f32.gmra.mxu0 %v559
    %v627 = vpop.f32.mrf.mxu0
    %v628 = vadd.f32 %v556, %v627
    %v629 = vpop.f32.mrf.mxu0
    %630 = vdwg.mxu0
    %vm631 = vcmask 49152
    %632 = vst.msk [vmem:[#allocation3] sm:$0x1] %vm631, %v628
    // Predicated region
    $region50: #{tpu_custom_call.1} parent=1 // pred_check
      _
    $region51: #{tpu_custom_call.1} parent=1 // pred_check_branch
      %634 = sbr.rel (0) target = $region53
    $region52: #{tpu_custom_call.1} parent=1 // pred_region
      %s636 = ssub.s32 16, 16
      %637 = vsyncadd [#allocation4], %s636
      %s639 = sshll.u32 [#allocation3], 4
      %s640 = int_to_ptr.vmem [resolvable:$true] %s639
      %642 = dma.vmem_to_hbm [thread:$0]  %s640, 16, %s12, [#allocation4]
    $region53: #{tpu_custom_call.1} parent=1 // pred_fallthru
      _
    // Predicated region
    $region54: #{tpu_custom_call.1} parent=1 // pred_check
      _
    $region55: #{tpu_custom_call.1} parent=1 // pred_check_branch
      %644 = sbr.rel (0) target = $region57
    $region56: #{tpu_custom_call.1} parent=1 // pred_region
      %645 = dma.done [#allocation4], 16
    $region57: #{tpu_custom_call.1} parent=1 // pred_fallthru
      _
    %646 = vsyncpa [#allocation4], 1

</llo_original>
